<compile_context>
chip_gen: v6e
topology: v6e:2x2x1
jax: 0.10.0
libtpu: 0.0.40
codegen_flags: <defaults>
</compile_context>

<pallas_src>
import functools
import numpy as np
import jax
import jax.numpy as jnp
from jax.experimental import pallas as pl
from jax.experimental.pallas import tpu as pltpu

_INV_SQRT2 = 0.7071067811865476

# Cast matmul operands to bf16 on v6e/v7x for MXU throughput (requires
# relaxing the test tolerance to ~1e-2); kept f32 here for 1e-4 parity with
# the PyTorch reference path.  LN/GELU always run on the f32 accumulator.
_MATMUL_DTYPE = jnp.float32


# ---------------------------- Pallas kernels ----------------------------

def _conv_ln_gelu_kernel(x_ref, w_ref, p_ref, o_ref):
    # Patchified conv (stride == kernel) as a matmul, fused with LayerNorm2d
    # (channel LayerNorm, eps=1e-6) and exact-erf GELU (torch.nn.GELU default).
    # x: (tm, K)   w: (K, C)   p: (3, C) rows = [conv bias, ln weight, ln bias]
    y = jnp.dot(x_ref[...], w_ref[...], preferred_element_type=jnp.float32)
    y = y + p_ref[0:1, :]
    u = jnp.mean(y, axis=-1, keepdims=True)
    d = y - u
    var = jnp.mean(d * d, axis=-1, keepdims=True)
    z = p_ref[1:2, :] * (d * jax.lax.rsqrt(var + 1e-6)) + p_ref[2:3, :]
    o_ref[...] = z * 0.5 * (1.0 + jax.lax.erf(z * _INV_SQRT2))


def _conv_ln_gelu_proj_kernel(x_ref, w_ref, p_ref, w3_ref, b3_ref, o_ref):
    # Second patch conv + LN2d + GELU fused with the trailing 1x1 conv (w3),
    # so the (tm, hidden) intermediate never touches HBM.
    y = jnp.dot(x_ref[...], w_ref[...], preferred_element_type=jnp.float32)
    y = y + p_ref[0:1, :]
    u = jnp.mean(y, axis=-1, keepdims=True)
    d = y - u
    var = jnp.mean(d * d, axis=-1, keepdims=True)
    z = p_ref[1:2, :] * (d * jax.lax.rsqrt(var + 1e-6)) + p_ref[2:3, :]
    g = z * 0.5 * (1.0 + jax.lax.erf(z * _INV_SQRT2))
    o_ref[...] = (jnp.dot(g.astype(w3_ref.dtype), w3_ref[...],
                          preferred_element_type=jnp.float32) + b3_ref[...])


def _pool_levels_kernel(num_levels, m0_ref, f_ref, mb_ref, uw_ref, ub_ref,
                        o_ref, carry_ref, pooled_ref):
    # grid = (B, L).  Per batch row the carried masks_out tensor and the
    # pooled accumulator stay in VMEM scratch across the (arbitrary) level
    # axis; the up_dim projection runs once at the last level:
    #   mean_l(pooled_l @ W + b) == (mean_l pooled_l) @ W + b
    lvl = pl.program_id(1)

    @pl.when(lvl == 0)
    def _():
        carry_ref[...] = m0_ref[...]
        pooled_ref[...] = jnp.zeros_like(pooled_ref)

    new_m = (carry_ref[...] + f_ref[...]) * mb_ref[...]
    carry_ref[...] = new_m
    pooled_ref[...] += jnp.mean(new_m, axis=0, keepdims=True)

    @pl.when(lvl == num_levels - 1)
    def _():
        o_ref[...] = (jnp.dot(pooled_ref[...] * (1.0 / num_levels), uw_ref[...],
                              preferred_element_type=jnp.float32) + ub_ref[...])


# ---------------------------- kernel wrappers ----------------------------

def _row_tiling(n):
    """Pick a row tile (>=128 when possible, 512 preferred) and padded rows."""
    for t in (1024, 512, 256, 128):
        if n % t == 0:
            return t, n
    if n <= 128:
        tm = ((n + 7) // 8) * 8
        return tm, tm
    tm = 512 if n > 512 else 128
    return tm, ((n + tm - 1) // tm) * tm


def _pad_rows(x, n_pad):
    n = x.shape[0]
    if n_pad == n:
        return x
    return jnp.pad(x, ((0, n_pad - n), (0, 0)))


def conv_ln_gelu(x_rows, w, ln_pack):
    n, k = x_rows.shape
    c = w.shape[1]
    tm, n_pad = _row_tiling(n)
    xp = _pad_rows(x_rows.astype(_MATMUL_DTYPE), n_pad)
    out = pl.pallas_call(
        _conv_ln_gelu_kernel,
        out_shape=jax.ShapeDtypeStruct((n_pad, c), jnp.float32),
        grid=(n_pad // tm,),
        in_specs=[
            pl.BlockSpec((tm, k), lambda i: (i, 0)),
            pl.BlockSpec((k, c), lambda i: (0, 0)),
            pl.BlockSpec((3, c), lambda i: (0, 0)),
        ],
        out_specs=pl.BlockSpec((tm, c), lambda i: (i, 0)),
        compiler_params=pltpu.CompilerParams(dimension_semantics=("parallel",)),
    )(xp, w.astype(_MATMUL_DTYPE), ln_pack)
    return out[:n] if n_pad != n else out


def conv_ln_gelu_proj(x_rows, w, ln_pack, w3, b3):
    n, k = x_rows.shape
    c = w.shape[1]
    e = w3.shape[1]
    tm, n_pad = _row_tiling(n)
    xp = _pad_rows(x_rows.astype(_MATMUL_DTYPE), n_pad)
    out = pl.pallas_call(
        _conv_ln_gelu_proj_kernel,
        out_shape=jax.ShapeDtypeStruct((n_pad, e), jnp.float32),
        grid=(n_pad // tm,),
        in_specs=[
            pl.BlockSpec((tm, k), lambda i: (i, 0)),
            pl.BlockSpec((k, c), lambda i: (0, 0)),
            pl.BlockSpec((3, c), lambda i: (0, 0)),
            pl.BlockSpec((c, e), lambda i: (0, 0)),
            pl.BlockSpec((1, e), lambda i: (0, 0)),
        ],
        out_specs=pl.BlockSpec((tm, e), lambda i: (i, 0)),
        compiler_params=pltpu.CompilerParams(dimension_semantics=("parallel",)),
    )(xp, w.astype(_MATMUL_DTYPE), ln_pack, w3.astype(_MATMUL_DTYPE),
      b3.reshape(1, e))
    return out[:n] if n_pad != n else out


def pool_levels(masks_out, feats, mbin, up_w, up_b):
    # masks_out: (B, S, C)   feats: (L, B, S, C)   mbin: (B, S, 1)
    num_levels, bs, s, c = feats.shape
    d = up_w.shape[1]
    kernel = functools.partial(_pool_levels_kernel, num_levels)
    return pl.pallas_call(
        kernel,
        out_shape=jax.ShapeDtypeStruct((bs, d), jnp.float32),
        grid=(bs, num_levels),
        in_specs=[
            pl.BlockSpec((None, s, c), lambda b, l: (b, 0, 0)),
            pl.BlockSpec((None, None, s, c), lambda b, l: (l, b, 0, 0)),
            pl.BlockSpec((None, s, 1), lambda b, l: (b, 0, 0)),
            pl.BlockSpec((c, d), lambda b, l: (0, 0)),
            pl.BlockSpec((1, d), lambda b, l: (0, 0)),
        ],
        out_specs=pl.BlockSpec((1, d), lambda b, l: (b, 0)),
        scratch_shapes=[
            pltpu.VMEM((s, c), jnp.float32),   # carried masks_out (per batch row)
            pltpu.VMEM((1, c), jnp.float32),   # pooled-mean accumulator
        ],
        compiler_params=pltpu.CompilerParams(
            dimension_semantics=("parallel", "arbitrary")),
    )(masks_out, feats, mbin, up_w, up_b.reshape(1, d))


# ---------------------------- plain-JAX glue ----------------------------
# TODO(synk): patch extraction (im2col) and the bilinear mask resize stay as
# XLA-level copies; fully DMA-ing strided patches inside the conv kernel via
# index_map would remove one activation pass but is not done here.

def _im2col_nonoverlap_nchw(x_nchw, k):
    bs, c, h, w = x_nchw.shape
    ho, wo = h // k, w // k
    p = x_nchw.reshape(bs, c, ho, k, wo, k)
    p = p.transpose(0, 2, 4, 1, 3, 5)          # (B, ho, wo, c, k, k)
    return p.reshape(bs * ho * wo, c * k * k), ho, wo


def _im2col_nonoverlap_tokens(rows, bs, h_in, w_in, k):
    # rows: (bs*h_in*w_in, c) in (B, h, w) token order; build (c, kh, kw)
    # ordered patches directly (skips the NHWC->NCHW round trip).
    c = rows.shape[1]
    ho, wo = h_in // k, w_in // k
    p = rows.reshape(bs, ho, k, wo, k, c).transpose(0, 1, 3, 5, 2, 4)
    return p.reshape(bs * ho * wo, c * k * k), ho, wo


def _pt_bilinear_matrix(in_size, out_size):
    # Matches F.interpolate(mode='bilinear', align_corners=False, antialias=False)
    scale = in_size / out_size
    m = np.zeros((out_size, in_size), dtype=np.float32)
    for j in range(out_size):
        src = max((j + 0.5) * scale - 0.5, 0.0)
        i0 = min(int(np.floor(src)), in_size - 1)
        i1 = min(i0 + 1, in_size - 1)
        lam = src - i0
        m[j, i0] += 1.0 - lam
        m[j, i1] += lam
    return jnp.asarray(m)


def init_params(key, hidden_dim, embed_dim, out_dim, patch_size):
    ks = patch_size // 2
    c1 = hidden_dim // 4
    keys = jax.random.split(key, 12)

    def w(k, shape, scale=0.05):
        return jax.random.normal(k, shape, jnp.float32) * scale

    b1 = w(keys[1], (c1,), 0.01)
    b2 = w(keys[3], (hidden_dim,), 0.01)
    return {
        # conv weights stored as (fan_in, fan_out) so rows @ w matches nn.Conv2d
        "w1": w(keys[0], (c1, 4, ks, ks)).reshape(c1, 4 * ks * ks).T,
        # packed per-channel params: rows = [conv bias, ln weight, ln bias]
        "ln1_pack": jnp.stack([b1,
                               1.0 + w(keys[8], (c1,), 0.02),
                               w(keys[9], (c1,), 0.02)], axis=0),
        "w2": w(keys[2], (hidden_dim, c1, 2, 2)).reshape(hidden_dim, c1 * 4).T,
        "ln2_pack": jnp.stack([b2,
                               1.0 + w(keys[10], (hidden_dim,), 0.02),
                               w(keys[11], (hidden_dim,), 0.02)], axis=0),
        "w3": w(keys[4], (embed_dim, hidden_dim, 1, 1)).reshape(embed_dim, hidden_dim).T,
        "b3": w(keys[5], (embed_dim,), 0.01),
        "up_w": w(keys[6], (out_dim, embed_dim)).T,   # nn.Linear (out,in) -> (in,out)
        "up_b": w(keys[7], (out_dim,), 0.01),
    }


def region_encoder_forward(params, images, masks, image_features, patch_size):
    bs = images.shape[0]
    masks_f = masks.astype(images.dtype)
    masks_in = jnp.concatenate([images, masks_f], axis=1)          # (B, 4, H, W)

    ks = patch_size // 2
    # mask_embedding stage 1: conv(4 -> hid/4, k=ks, s=ks) + LN2d + GELU
    x1, h1, w1 = _im2col_nonoverlap_nchw(masks_in, ks)
    y1 = conv_ln_gelu(x1, params["w1"], params["ln1_pack"])

    # stage 2: conv(hid/4 -> hid, 2, 2) + LN2d + GELU fused with the
    # 1x1 conv(hid -> embed) in a single kernel.
    x2, h, w = _im2col_nonoverlap_tokens(y1, bs, h1, w1, 2)
    y3 = conv_ln_gelu_proj(x2, params["w2"], params["ln2_pack"],
                           params["w3"], params["b3"])
    masks_out = y3.reshape(bs, h * w, -1)                          # (B, S, E)

    # masks_binary = interpolate(masks, (h, w), bilinear, align_corners=False) > 0.5
    big_h, big_w = masks.shape[-2:]
    mh = _pt_bilinear_matrix(big_h, h)
    mw = _pt_bilinear_matrix(big_w, w)
    mbin = jnp.einsum("hH,bHW,wW->bhw", mh, masks_f[:, 0].astype(jnp.float32), mw)
    mbin = (mbin > 0.5).astype(jnp.float32).reshape(bs, h * w, 1)

    # convert every feature level to token-major (B, S, E) and stack to (L, B, S, E)
    feats = []
    for feat in image_features:
        if feat.ndim == 3:                    # (B, h*w, E) token-major
            feats.append(feat.astype(jnp.float32))
        else:                                 # (B, E, h, w) NCHW
            feats.append(feat.transpose(0, 2, 3, 1).reshape(bs, h * w, -1)
                         .astype(jnp.float32))
    feats = jnp.stack(feats, axis=0)

    # fused per-level loop: carried masks_out stays in VMEM scratch, pooled
    # vectors are averaged over levels, up_dim applied once at the end.
    return pool_levels(masks_out, feats, mbin, params["up_w"], params["up_b"])


# ---------------------------- pure-JAX reference ----------------------------

def reference_forward(params, images, masks, image_features, patch_size):
    def gelu(x):
        return x * 0.5 * (1.0 + jax.lax.erf(x * _INV_SQRT2))

    def ln2d(y, g, b):
        u = y.mean(-1, keepdims=True)
        s = ((y - u) ** 2).mean(-1, keepdims=True)
        return g * (y - u) / jnp.sqrt(s + 1e-6) + b

    bs = images.shape[0]
    masks_f = masks.astype(images.dtype)
    x = jnp.concatenate([images, masks_f], axis=1)
    ks = patch_size // 2
    x1, h1, w1 = _im2col_nonoverlap_nchw(x, ks)
    b1, g1, beta1 = params["ln1_pack"]
    y1 = gelu(ln2d(x1 @ params["w1"] + b1, g1, beta1))
    y1 = y1.reshape(bs, h1, w1, -1).transpose(0, 3, 1, 2)
    x2, h, w = _im2col_nonoverlap_nchw(y1, 2)
    b2, g2, beta2 = params["ln2_pack"]
    y2 = gelu(ln2d(x2 @ params["w2"] + b2, g2, beta2))
    y3 = y2 @ params["w3"] + params["b3"]
    m_out = y3.reshape(bs, h * w, -1)
    mh = _pt_bilinear_matrix(masks.shape[-2], h)
    mw = _pt_bilinear_matrix(masks.shape[-1], w)
    mbin = jnp.einsum("hH,bHW,wW->bhw", mh, masks_f[:, 0].astype(jnp.float32), mw)
    mbin = (mbin > 0.5).astype(jnp.float32).reshape(bs, h * w, 1)
    outs = []
    for feat in image_features:
        f = feat if feat.ndim == 3 else feat.transpose(0, 2, 3, 1).reshape(bs, h * w, -1)
        m_out = (m_out + f) * mbin
        outs.append(m_out.mean(axis=1) @ params["up_w"] + params["up_b"])
    return jnp.mean(jnp.stack(outs, axis=0), axis=0)


# ---------------------------- main ----------------------------

if __name__ == "__main__":
    # TODO(synk): only mask_pool_type='mean' (the default path) is implemented;
    # 'cross_attn' and 'grid_sample' (data-dependent multinomial sampling /
    # grid_sample gather) are not translated.
    patch_size = 4        # must be even; kernel_size = patch_size // 2 = 2
    hidden_dim = 32
    embed_dim = 32
    out_dim = 32
    bs, H, W = 2, 16, 16

    key = jax.random.PRNGKey(0)
    k_img, k_msk, k_f3, k_f4, k_par = jax.random.split(key, 5)
    images = jax.random.normal(k_img, (bs, 3, H, W), jnp.float32)
    masks = (jax.random.uniform(k_msk, (bs, 1, H, W)) > 0.5).astype(jnp.float32)

    h = H // patch_size
    w = W // patch_size
    image_features = [
        jax.random.normal(k_f3, (bs, h * w, embed_dim), jnp.float32) * 0.1,  # 3-D level
        jax.random.normal(k_f4, (bs, embed_dim, h, w), jnp.float32) * 0.1,   # 4-D NCHW level
    ]

    params = init_params(k_par, hidden_dim, embed_dim, out_dim, patch_size)

    out = region_encoder_forward(params, images, masks, image_features, patch_size)
    out = jax.block_until_ready(out)

    ref = reference_forward(params, images, masks, image_features, patch_size)
    np.testing.assert_allclose(np.asarray(out), np.asarray(ref), rtol=1e-4, atol=1e-4)
    assert out.shape == (bs, out_dim)
    print("KERNEL_OK")
</pallas_src>

<mosaic_0001>
module attributes {stable_mosaic.version = 11 : i64} {
  func.func @_conv_ln_gelu_kernel(%arg0: i32, %arg1: memref<128x16xf32, #tpu.memory_space<vmem>>, %arg2: memref<16x8xf32, #tpu.memory_space<vmem>>, %arg3: memref<3x8xf32, #tpu.memory_space<vmem>>, %arg4: memref<128x8xf32, #tpu.memory_space<vmem>>) attributes {dimension_semantics = [#tpu.dimension_semantics<parallel>], iteration_bounds = array<i64: 1>, scalar_prefetch = 0 : i64, scratch_operands = 0 : i64, tpu.core_type = #tpu.core_type<tc>, window_params = [{transform_indices = @transform_0, window_bounds = array<i64: 128, 16>}, {pipeline_mode = #tpu.pipeline_mode<synchronous>, transform_indices = @transform_1, window_bounds = array<i64: 16, 8>}, {pipeline_mode = #tpu.pipeline_mode<synchronous>, transform_indices = @transform_2, window_bounds = array<i64: 3, 8>}, {transform_indices = @transform_3, window_bounds = array<i64: 128, 8>}]} {
    %c0 = arith.constant 0 : index
    %c0_0 = arith.constant 0 : index
    %0 = vector.load %arg1[%c0, %c0_0] : memref<128x16xf32, #tpu.memory_space<vmem>>, vector<128x16xf32>
    %c0_1 = arith.constant 0 : index
    %c0_2 = arith.constant 0 : index
    %1 = vector.load %arg2[%c0_1, %c0_2] : memref<16x8xf32, #tpu.memory_space<vmem>>, vector<16x8xf32>
    %cst = arith.constant dense<0.000000e+00> : vector<128x8xf32>
    %2 = tpu.matmul %0, %1, %cst {dimension_numbers = #tpu.dot_dimension_numbers<[1], [0], [0], [1], [0, 0, 1, 1], [], []>} : vector<128x16xf32>, vector<16x8xf32>, vector<128x8xf32> -> vector<128x8xf32>
    %c0_3 = arith.constant 0 : index
    %c0_4 = arith.constant 0 : index
    %3 = vector.load %arg3[%c0_3, %c0_4] : memref<3x8xf32, #tpu.memory_space<vmem>>, vector<1x8xf32>
    %4 = vector.broadcast %3 : vector<1x8xf32> to vector<128x8xf32>
    %5 = arith.addf %2, %4 : vector<128x8xf32>
    %cst_5 = arith.constant dense<0.000000e+00> : vector<128xf32>
    %6 = vector.multi_reduction <add>, %5, %cst_5 [1] : vector<128x8xf32> to vector<128xf32>
    %7 = vector.shape_cast %6 : vector<128xf32> to vector<128x1xf32>
    %cst_6 = arith.constant 8.000000e+00 : f32
    %8 = vector.broadcast %cst_6 : f32 to vector<128x1xf32>
    %9 = arith.divf %7, %8 : vector<128x1xf32>
    %10 = vector.broadcast %9 : vector<128x1xf32> to vector<128x8xf32>
    %11 = arith.subf %5, %10 : vector<128x8xf32>
    %12 = arith.mulf %11, %11 : vector<128x8xf32>
    %cst_7 = arith.constant dense<0.000000e+00> : vector<128xf32>
    %13 = vector.multi_reduction <add>, %12, %cst_7 [1] : vector<128x8xf32> to vector<128xf32>
    %14 = vector.shape_cast %13 : vector<128xf32> to vector<128x1xf32>
    %cst_8 = arith.constant 8.000000e+00 : f32
    %15 = vector.broadcast %cst_8 : f32 to vector<128x1xf32>
    %16 = arith.divf %14, %15 : vector<128x1xf32>
    %c1 = arith.constant 1 : index
    %c0_9 = arith.constant 0 : index
    %17 = vector.load %arg3[%c1, %c0_9] : memref<3x8xf32, #tpu.memory_space<vmem>>, vector<1x8xf32>
    %cst_10 = arith.constant 9.99999997E-7 : f32
    %18 = vector.broadcast %cst_10 : f32 to vector<128x1xf32>
    %19 = arith.addf %16, %18 : vector<128x1xf32>
    %20 = math.rsqrt %19 : vector<128x1xf32>
    %21 = vector.broadcast %20 : vector<128x1xf32> to vector<128x8xf32>
    %22 = arith.mulf %11, %21 : vector<128x8xf32>
    %23 = vector.broadcast %17 : vector<1x8xf32> to vector<128x8xf32>
    %24 = arith.mulf %23, %22 : vector<128x8xf32>
    %c2 = arith.constant 2 : index
    %c0_11 = arith.constant 0 : index
    %25 = vector.load %arg3[%c2, %c0_11] : memref<3x8xf32, #tpu.memory_space<vmem>>, vector<1x8xf32>
    %26 = vector.broadcast %25 : vector<1x8xf32> to vector<128x8xf32>
    %27 = arith.addf %24, %26 : vector<128x8xf32>
    %cst_12 = arith.constant 5.000000e-01 : f32
    %28 = vector.broadcast %cst_12 : f32 to vector<128x8xf32>
    %29 = arith.mulf %27, %28 : vector<128x8xf32>
    %cst_13 = arith.constant 0.707106769 : f32
    %30 = vector.broadcast %cst_13 : f32 to vector<128x8xf32>
    %31 = arith.mulf %27, %30 : vector<128x8xf32>
    %32 = math.erf %31 : vector<128x8xf32>
    %cst_14 = arith.constant 1.000000e+00 : f32
    %33 = vector.broadcast %cst_14 : f32 to vector<128x8xf32>
    %34 = arith.addf %33, %32 : vector<128x8xf32>
    %35 = arith.mulf %29, %34 : vector<128x8xf32>
    %c0_15 = arith.constant 0 : index
    %c0_16 = arith.constant 0 : index
    %36 = vector.load %arg4[%c0_15, %c0_16] : memref<128x8xf32, #tpu.memory_space<vmem>>, vector<128x8xf32>
    tpu.vector_store %arg4[%c0_15, %c0_16], %35 {strides = array<i32>} : memref<128x8xf32, #tpu.memory_space<vmem>>, vector<128x8xf32>,
    return
  }
  func.func @transform_0(%arg0: i32) -> (i32, i32) {
    %c0_i32 = arith.constant 0 : i32
    %c0_i32_0 = arith.constant 0 : i32
    return %arg0, %c0_i32 : i32, i32
  }
  func.func @transform_1(%arg0: i32) -> (i32, i32) {
    %c0_i32 = arith.constant 0 : i32
    %c0_i32_0 = arith.constant 0 : i32
    %c0_i32_1 = arith.constant 0 : i32
    return %c0_i32, %c0_i32_0 : i32, i32
  }
  func.func @transform_2(%arg0: i32) -> (i32, i32) {
    %c0_i32 = arith.constant 0 : i32
    %c0_i32_0 = arith.constant 0 : i32
    %c0_i32_1 = arith.constant 0 : i32
    return %c0_i32, %c0_i32_0 : i32, i32
  }
  func.func @transform_3(%arg0: i32) -> (i32, i32) {
    %c0_i32 = arith.constant 0 : i32
    %c0_i32_0 = arith.constant 0 : i32
    return %arg0, %c0_i32 : i32, i32
  }
}

</mosaic_0001>

<llo_original>
// kernel: tpu_custom_call.1
$region0: #{tpu_custom_call.1}
  #allocation0 [shape = 'u32[]', space=smem, size = 0x4, offset = 0x4, fixed_abs, tag = 'smem constant byte address 0x4 - core index']
  #allocation1 [shape = 'u32[144,128]{1,0:T(1,128)}', space=vmem, size = 0x12000, scoped, tag = 'internal scratch']
  %s0 = inlined_call_operand.vmem [shape: f32[128,16], index: 0, kind: input, shape index: {}]
  %s1 = inlined_call_operand.vmem [shape: f32[16,8], index: 1, kind: input, shape index: {}]
  %s2 = inlined_call_operand.vmem [shape: f32[3,8], index: 2, kind: input, shape index: {}]
  %s3 = inlined_call_operand.vmem [shape: f32[128,8], index: 3, kind: output, shape index: {}]
  %s4 = sld [smem:[#allocation0]]
  $region22: #{tpu_custom_call.1} parent=0
    _
  %s6 = ssub.s32 1, %s4
  %s7 = scalar_select 0, %s6, %s4
  // Predicated region
  $region2: #{tpu_custom_call.1} parent=0 // pred_check
    _
  $region3: #{tpu_custom_call.1} parent=0 // pred_check_branch
    %9 = sbr.rel (0) target = $region5
  $region4: #{tpu_custom_call.1} parent=0 // pred_region
    _
  $region5: #{tpu_custom_call.1} parent=0 // pred_fallthru
    _
  // Predicated region
  $region6: #{tpu_custom_call.1} parent=0 // pred_check
    _
  $region7: #{tpu_custom_call.1} parent=0 // pred_check_branch
    %11 = sbr.rel (0) target = $region9
  $region8: #{tpu_custom_call.1} parent=0 // pred_region
    _
  $region9: #{tpu_custom_call.1} parent=0 // pred_fallthru
    _
  // Predicated region
  $region10: #{tpu_custom_call.1} parent=0 // pred_check
    _
  $region11: #{tpu_custom_call.1} parent=0 // pred_check_branch
    %13 = sbr.rel (0) target = $region13
  $region12: #{tpu_custom_call.1} parent=0 // pred_region
    _
  $region13: #{tpu_custom_call.1} parent=0 // pred_fallthru
    _
  %v14 = vld [vmem:[%s0] sm:$0xff]
  %v15 = vld [vmem:[%s0 + $0x8] sm:$0xff]
  %v16 = vld [vmem:[%s0 + $0x10] sm:$0xff]
  %v17 = vld [vmem:[%s0 + $0x18] sm:$0xff]
  %v18 = vld [vmem:[%s0 + $0x20] sm:$0xff]
  %v19 = vld [vmem:[%s0 + $0x28] sm:$0xff]
  %v20 = vld [vmem:[%s0 + $0x30] sm:$0xff]
  %v21 = vld [vmem:[%s0 + $0x38] sm:$0xff]
  %v22 = vld [vmem:[%s0 + $0x40] sm:$0xff]
  %v23 = vld [vmem:[%s0 + $0x48] sm:$0xff]
  %v24 = vld [vmem:[%s0 + $0x50] sm:$0xff]
  %v25 = vld [vmem:[%s0 + $0x58] sm:$0xff]
  %v26 = vld [vmem:[%s0 + $0x60] sm:$0xff]
  %v27 = vld [vmem:[%s0 + $0x68] sm:$0xff]
  %v28 = vld [vmem:[%s0 + $0x70] sm:$0xff]
  %v29 = vld [vmem:[%s0 + $0x78] sm:$0xff]
  %v30 = vld [vmem:[%s1] sm:$0xff]
  %v31 = vld [vmem:[%s1 + $0x8] sm:$0xff]
  %v32 = vld [vmem:[%s2] sm:$0x1]
  %v33 = vlaneseq
  %v34 = vshrl.u32 %v33, 7
  %v35 = vsub.s32 0, %v34
  %v36 = vrot.slane %v32, %v35
  %vm37 = vcmask 130048
  %v39 = vsel %vm37, %v14, 0
  %v42 = vsel %vm37, %v15, 0
  %v45 = vsel %vm37, %v16, 0
  %v48 = vsel %vm37, %v17, 0
  %v51 = vsel %vm37, %v18, 0
  %v54 = vsel %vm37, %v19, 0
  %v57 = vsel %vm37, %v20, 0
  %v60 = vsel %vm37, %v21, 0
  %v63 = vsel %vm37, %v22, 0
  %v66 = vsel %vm37, %v23, 0
  %v69 = vsel %vm37, %v24, 0
  %v72 = vsel %vm37, %v25, 0
  %v75 = vsel %vm37, %v26, 0
  %v78 = vsel %vm37, %v27, 0
  %v81 = vsel %vm37, %v28, 0
  %v84 = vsel %vm37, %v29, 0
  %86 = vmatprep.subr.mxu0 0.0
  %87 = vmatpush1.msra.mxu0 0.0
  %88 = vmatprep.subr.mxu0 0.0
  %89 = vmatpush1.msra.mxu0 0.0
  %90 = vmatprep.subr.mxu0 0.0
  %91 = vmatpush1.msra.mxu0 0.0
  %92 = vmatprep.subr.mxu0 0.0
  %93 = vmatpush1.msra.mxu0 0.0
  %94 = vmatprep.subr.mxu0 0.0
  %95 = vmatpush1.msra.mxu0 0.0
  %96 = vmatprep.subr.mxu0 0.0
  %97 = vmatpush1.msra.mxu0 0.0
  %98 = vmatprep.subr.mxu0 0.0
  %99 = vmatpush1.msra.mxu0 0.0
  %100 = vmatprep.subr.mxu0 0.0
  %101 = vmatpush1.msra.mxu0 0.0
  %102 = vmatprep.subr.mxu0 0.0
  %103 = vmatpush1.msra.mxu0 0.0
  %104 = vmatprep.subr.mxu0 0.0
  %105 = vmatpush1.msra.mxu0 0.0
  %106 = vmatprep.subr.mxu0 0.0
  %107 = vmatpush1.msra.mxu0 0.0
  %108 = vmatprep.subr.mxu0 0.0
  %109 = vmatpush1.msra.mxu0 0.0
  %110 = vmatprep.subr.mxu0 0.0
  %111 = vmatpush1.msra.mxu0 0.0
  %112 = vmatprep.subr.mxu0 0.0
  %113 = vmatpush1.msra.mxu0 0.0
  %114 = vmatprep.subr.mxu0 0.0
  %115 = vmatpush1.msra.mxu0 %v31
  %116 = vmatprep.subr.mxu0 0.0
  %117 = vmatpush1.msra.mxu0 %v30
  %118 = vmatprep.subr.mxu0 0.0
  %119 = vmatpush2.msra.mxu0 0.0
  %120 = vmatprep.subr.mxu0 0.0
  %121 = vmatpush2.msra.mxu0 0.0
  %122 = vmatprep.subr.mxu0 0.0
  %123 = vmatpush2.msra.mxu0 0.0
  %124 = vmatprep.subr.mxu0 0.0
  %125 = vmatpush2.msra.mxu0 0.0
  %126 = vmatprep.subr.mxu0 0.0
  %127 = vmatpush2.msra.mxu0 0.0
  %128 = vmatprep.subr.mxu0 0.0
  %129 = vmatpush2.msra.mxu0 0.0
  %130 = vmatprep.subr.mxu0 0.0
  %131 = vmatpush2.msra.mxu0 0.0
  %132 = vmatprep.subr.mxu0 0.0
  %133 = vmatpush2.msra.mxu0 0.0
  %134 = vmatprep.subr.mxu0 0.0
  %135 = vmatpush2.msra.mxu0 0.0
  %136 = vmatprep.subr.mxu0 0.0
  %137 = vmatpush2.msra.mxu0 0.0
  %138 = vmatprep.subr.mxu0 0.0
  %139 = vmatpush2.msra.mxu0 0.0
  %140 = vmatprep.subr.mxu0 0.0
  %141 = vmatpush2.msra.mxu0 0.0
  %142 = vmatprep.subr.mxu0 0.0
  %143 = vmatpush2.msra.mxu0 0.0
  %144 = vmatprep.subr.mxu0 0.0
  %145 = vmatpush2.msra.mxu0 0.0
  %146 = vmatprep.subr.mxu0 0.0
  %147 = vmatpush2.msra.mxu0 0.0
  %148 = vmatprep.subr.mxu0 0.0
  %149 = vmatpush2.msra.mxu0 0.0
  %150 = vmatprep.mubr.f32.mxu0 0.0
  %151 = vmatmul.mubr.f32.gmra.mxu0 %v39
  %v152 = vpop.f32.mrf.mxu0
  %v153 = vadd.f32 %v36, %v152
  %v154 = vpop.f32.mrf.mxu0
  %155 = vmatprep.mubr.f32.mxu0 0.0
  %156 = vmatmul.mubr.f32.gmra.mxu0 %v42
  %v157 = vpop.f32.mrf.mxu0
  %v158 = vadd.f32 %v36, %v157
  %v159 = vpop.f32.mrf.mxu0
  %160 = vmatprep.mubr.f32.mxu0 0.0
  %161 = vmatmul.mubr.f32.gmra.mxu0 %v45
  %v162 = vpop.f32.mrf.mxu0
  %v163 = vadd.f32 %v36, %v162
  %v164 = vpop.f32.mrf.mxu0
  %165 = vmatprep.mubr.f32.mxu0 0.0
  %166 = vmatmul.mubr.f32.gmra.mxu0 %v48
  %v167 = vpop.f32.mrf.mxu0
  %v168 = vadd.f32 %v36, %v167
  %v169 = vpop.f32.mrf.mxu0
  %170 = vmatprep.mubr.f32.mxu0 0.0
  %171 = vmatmul.mubr.f32.gmra.mxu0 %v51
  %v172 = vpop.f32.mrf.mxu0
  %v173 = vadd.f32 %v36, %v172
  %v174 = vpop.f32.mrf.mxu0
  %175 = vmatprep.mubr.f32.mxu0 0.0
  %176 = vmatmul.mubr.f32.gmra.mxu0 %v54
  %v177 = vpop.f32.mrf.mxu0
  %v178 = vadd.f32 %v36, %v177
  %v179 = vpop.f32.mrf.mxu0
  %180 = vmatprep.mubr.f32.mxu0 0.0
  %181 = vmatmul.mubr.f32.gmra.mxu0 %v57
  %v182 = vpop.f32.mrf.mxu0
  %v183 = vadd.f32 %v36, %v182
  %v184 = vpop.f32.mrf.mxu0
  %185 = vmatprep.mubr.f32.mxu0 0.0
  %186 = vmatmul.mubr.f32.gmra.mxu0 %v60
  %v187 = vpop.f32.mrf.mxu0
  %v188 = vadd.f32 %v36, %v187
  %v189 = vpop.f32.mrf.mxu0
  %190 = vmatprep.mubr.f32.mxu0 0.0
  %191 = vmatmul.mubr.f32.gmra.mxu0 %v63
  %v192 = vpop.f32.mrf.mxu0
  %v193 = vadd.f32 %v36, %v192
  %v194 = vpop.f32.mrf.mxu0
  %195 = vmatprep.mubr.f32.mxu0 0.0
  %196 = vmatmul.mubr.f32.gmra.mxu0 %v66
  %v197 = vpop.f32.mrf.mxu0
  %v198 = vadd.f32 %v36, %v197
  %v199 = vpop.f32.mrf.mxu0
  %200 = vmatprep.mubr.f32.mxu0 0.0
  %201 = vmatmul.mubr.f32.gmra.mxu0 %v69
  %v202 = vpop.f32.mrf.mxu0
  %v203 = vadd.f32 %v36, %v202
  %v204 = vpop.f32.mrf.mxu0
  %205 = vmatprep.mubr.f32.mxu0 0.0
  %206 = vmatmul.mubr.f32.gmra.mxu0 %v72
  %v207 = vpop.f32.mrf.mxu0
  %v208 = vadd.f32 %v36, %v207
  %v209 = vpop.f32.mrf.mxu0
  %210 = vmatprep.mubr.f32.mxu0 0.0
  %211 = vmatmul.mubr.f32.gmra.mxu0 %v75
  %v212 = vpop.f32.mrf.mxu0
  %v213 = vadd.f32 %v36, %v212
  %v214 = vpop.f32.mrf.mxu0
  %215 = vmatprep.mubr.f32.mxu0 0.0
  %216 = vmatmul.mubr.f32.gmra.mxu0 %v78
  %v217 = vpop.f32.mrf.mxu0
  %v218 = vadd.f32 %v36, %v217
  %v219 = vpop.f32.mrf.mxu0
  %220 = vmatprep.mubr.f32.mxu0 0.0
  %221 = vmatmul.mubr.f32.gmra.mxu0 %v81
  %v222 = vpop.f32.mrf.mxu0
  %v223 = vadd.f32 %v36, %v222
  %v224 = vpop.f32.mrf.mxu0
  %225 = vmatprep.mubr.f32.mxu0 0.0
  %226 = vmatmul.mubr.f32.gmra.mxu0 %v84
  %v227 = vpop.f32.mrf.mxu0
  %v228 = vadd.f32 %v36, %v227
  %v229 = vpop.f32.mrf.mxu0
  %230 = vdwg.mxu0
  %vm231 = vcmask 64512
  %v232 = vsel %vm231, %v153, 0.0
  %233 = vadd.xlane.f32.xlu0 %v232
  %v234 = vpop.xlane.xlu0 %233
  %v235 = vsel %vm231, %v158, 0.0
  %236 = vadd.xlane.f32.xlu0 %v235
  %v237 = vpop.xlane.xlu0 %236
  %v238 = vsel %vm231, %v163, 0.0
  %239 = vadd.xlane.f32.xlu0 %v238
  %v240 = vpop.xlane.xlu0 %239
  %v241 = vsel %vm231, %v168, 0.0
  %242 = vadd.xlane.f32.xlu0 %v241
  %v243 = vpop.xlane.xlu0 %242
  %v244 = vsel %vm231, %v173, 0.0
  %245 = vadd.xlane.f32.xlu0 %v244
  %v246 = vpop.xlane.xlu0 %245
  %v247 = vsel %vm231, %v178, 0.0
  %248 = vadd.xlane.f32.xlu0 %v247
  %v249 = vpop.xlane.xlu0 %248
  %v250 = vsel %vm231, %v183, 0.0
  %251 = vadd.xlane.f32.xlu0 %v250
  %v252 = vpop.xlane.xlu0 %251
  %v253 = vsel %vm231, %v188, 0.0
  %254 = vadd.xlane.f32.xlu0 %v253
  %v255 = vpop.xlane.xlu0 %254
  %v256 = vsel %vm231, %v193, 0.0
  %257 = vadd.xlane.f32.xlu0 %v256
  %v258 = vpop.xlane.xlu0 %257
  %v259 = vsel %vm231, %v198, 0.0
  %260 = vadd.xlane.f32.xlu0 %v259
  %v261 = vpop.xlane.xlu0 %260
  %v262 = vsel %vm231, %v203, 0.0
  %263 = vadd.xlane.f32.xlu0 %v262
  %v264 = vpop.xlane.xlu0 %263
  %v265 = vsel %vm231, %v208, 0.0
  %266 = vadd.xlane.f32.xlu0 %v265
  %v267 = vpop.xlane.xlu0 %266
  %v268 = vsel %vm231, %v213, 0.0
  %269 = vadd.xlane.f32.xlu0 %v268
  %v270 = vpop.xlane.xlu0 %269
  %v271 = vsel %vm231, %v218, 0.0
  %272 = vadd.xlane.f32.xlu0 %v271
  %v273 = vpop.xlane.xlu0 %272
  %v274 = vsel %vm231, %v223, 0.0
  %275 = vadd.xlane.f32.xlu0 %v274
  %v276 = vpop.xlane.xlu0 %275
  %v277 = vsel %vm231, %v228, 0.0
  %278 = vadd.xlane.f32.xlu0 %v277
  %v279 = vpop.xlane.xlu0 %278
  %v280 = vrcp.pop 8.0
  %v281 = vmul.f32 %v234, %v280
  %v282 = vmul.f32 %v237, %v280
  %v283 = vmul.f32 %v240, %v280
  %v284 = vmul.f32 %v243, %v280
  %v285 = vmul.f32 %v246, %v280
  %v286 = vmul.f32 %v249, %v280
  %v287 = vmul.f32 %v252, %v280
  %v288 = vmul.f32 %v255, %v280
  %v289 = vmul.f32 %v258, %v280
  %v290 = vmul.f32 %v261, %v280
  %v291 = vmul.f32 %v264, %v280
  %v292 = vmul.f32 %v267, %v280
  %v293 = vmul.f32 %v270, %v280
  %v294 = vmul.f32 %v273, %v280
  %v295 = vmul.f32 %v276, %v280
  %v296 = vmul.f32 %v279, %v280
  %v297 = vsub.f32 %v153, %v281
  %v298 = vsub.f32 %v158, %v282
  %v299 = vsub.f32 %v163, %v283
  %v300 = vsub.f32 %v168, %v284
  %v301 = vsub.f32 %v173, %v285
  %v302 = vsub.f32 %v178, %v286
  %v303 = vsub.f32 %v183, %v287
  %v304 = vsub.f32 %v188, %v288
  %v305 = vsub.f32 %v193, %v289
  %v306 = vsub.f32 %v198, %v290
  %v307 = vsub.f32 %v203, %v291
  %v308 = vsub.f32 %v208, %v292
  %v309 = vsub.f32 %v213, %v293
  %v310 = vsub.f32 %v218, %v294
  %v311 = vsub.f32 %v223, %v295
  %v312 = vsub.f32 %v228, %v296
  %v313 = vmul.f32 %v297, %v297
  %v314 = vmul.f32 %v298, %v298
  %v315 = vmul.f32 %v299, %v299
  %v316 = vmul.f32 %v300, %v300
  %v317 = vmul.f32 %v301, %v301
  %v318 = vmul.f32 %v302, %v302
  %v319 = vmul.f32 %v303, %v303
  %v320 = vmul.f32 %v304, %v304
  %v321 = vmul.f32 %v305, %v305
  %v322 = vmul.f32 %v306, %v306
  %v323 = vmul.f32 %v307, %v307
  %v324 = vmul.f32 %v308, %v308
  %v325 = vmul.f32 %v309, %v309
  %v326 = vmul.f32 %v310, %v310
  %v327 = vmul.f32 %v311, %v311
  %v328 = vmul.f32 %v312, %v312
  %v329 = vsel %vm231, %v313, 0.0
  %330 = vadd.xlane.f32.xlu0 %v329
  %v331 = vpop.xlane.xlu0 %330
  %v332 = vsel %vm231, %v314, 0.0
  %333 = vadd.xlane.f32.xlu0 %v332
  %v334 = vpop.xlane.xlu0 %333
  %v335 = vsel %vm231, %v315, 0.0
  %336 = vadd.xlane.f32.xlu0 %v335
  %v337 = vpop.xlane.xlu0 %336
  %v338 = vsel %vm231, %v316, 0.0
  %339 = vadd.xlane.f32.xlu0 %v338
  %v340 = vpop.xlane.xlu0 %339
  %v341 = vsel %vm231, %v317, 0.0
  %342 = vadd.xlane.f32.xlu0 %v341
  %v343 = vpop.xlane.xlu0 %342
  %v344 = vsel %vm231, %v318, 0.0
  %345 = vadd.xlane.f32.xlu0 %v344
  %v346 = vpop.xlane.xlu0 %345
  %v347 = vsel %vm231, %v319, 0.0
  %348 = vadd.xlane.f32.xlu0 %v347
  %v349 = vpop.xlane.xlu0 %348
  %v350 = vsel %vm231, %v320, 0.0
  %351 = vadd.xlane.f32.xlu0 %v350
  %v352 = vpop.xlane.xlu0 %351
  %v353 = vsel %vm231, %v321, 0.0
  %354 = vadd.xlane.f32.xlu0 %v353
  %v355 = vpop.xlane.xlu0 %354
  %v356 = vsel %vm231, %v322, 0.0
  %357 = vadd.xlane.f32.xlu0 %v356
  %v358 = vpop.xlane.xlu0 %357
  %v359 = vsel %vm231, %v323, 0.0
  %360 = vadd.xlane.f32.xlu0 %v359
  %v361 = vpop.xlane.xlu0 %360
  %v362 = vsel %vm231, %v324, 0.0
  %363 = vadd.xlane.f32.xlu0 %v362
  %v364 = vpop.xlane.xlu0 %363
  %v365 = vsel %vm231, %v325, 0.0
  %366 = vadd.xlane.f32.xlu0 %v365
  %v367 = vpop.xlane.xlu0 %366
  %v368 = vsel %vm231, %v326, 0.0
  %369 = vadd.xlane.f32.xlu0 %v368
  %v370 = vpop.xlane.xlu0 %369
  %v371 = vsel %vm231, %v327, 0.0
  %372 = vadd.xlane.f32.xlu0 %v371
  %v373 = vpop.xlane.xlu0 %372
  %v374 = vsel %vm231, %v328, 0.0
  %375 = vadd.xlane.f32.xlu0 %v374
  %v376 = vpop.xlane.xlu0 %375
  %v377 = vmul.f32 %v331, %v280
  %v378 = vmul.f32 %v334, %v280
  %v379 = vmul.f32 %v337, %v280
  %v380 = vmul.f32 %v340, %v280
  %v381 = vmul.f32 %v343, %v280
  %v382 = vmul.f32 %v346, %v280
  %v383 = vmul.f32 %v349, %v280
  %v384 = vmul.f32 %v352, %v280
  %v385 = vmul.f32 %v355, %v280
  %v386 = vmul.f32 %v358, %v280
  %v387 = vmul.f32 %v361, %v280
  %v388 = vmul.f32 %v364, %v280
  %v389 = vmul.f32 %v367, %v280
  %v390 = vmul.f32 %v370, %v280
  %v391 = vmul.f32 %v373, %v280
  %v392 = vmul.f32 %v376, %v280
  %v393 = vld [vmem:[%s2 + $0x1] sm:$0x1]
  %v394 = vadd.f32 %v377, 1e-06
  %v395 = vadd.f32 %v378, 1e-06
  %v396 = vadd.f32 %v379, 1e-06
  %v397 = vadd.f32 %v380, 1e-06
  %v398 = vadd.f32 %v381, 1e-06
  %v399 = vadd.f32 %v382, 1e-06
  %v400 = vadd.f32 %v383, 1e-06
  %v401 = vadd.f32 %v384, 1e-06
  %v402 = vadd.f32 %v385, 1e-06
  %v403 = vadd.f32 %v386, 1e-06
  %v404 = vadd.f32 %v387, 1e-06
  %v405 = vadd.f32 %v388, 1e-06
  %v406 = vadd.f32 %v389, 1e-06
  %v407 = vadd.f32 %v390, 1e-06
  %v408 = vadd.f32 %v391, 1e-06
  %v409 = vadd.f32 %v392, 1e-06
  %v410 = vrsqrt.pop %v394
  %v411 = vrsqrt.pop %v395
  %v412 = vrsqrt.pop %v396
  %v413 = vrsqrt.pop %v397
  %v414 = vrsqrt.pop %v398
  %v415 = vrsqrt.pop %v399
  %v416 = vrsqrt.pop %v400
  %v417 = vrsqrt.pop %v401
  %v418 = vrsqrt.pop %v402
  %v419 = vrsqrt.pop %v403
  %v420 = vrsqrt.pop %v404
  %v421 = vrsqrt.pop %v405
  %v422 = vrsqrt.pop %v406
  %v423 = vrsqrt.pop %v407
  %v424 = vrsqrt.pop %v408
  %v425 = vrsqrt.pop %v409
  %v426 = vmul.f32 %v297, %v410
  %v427 = vmul.f32 %v298, %v411
  %v428 = vmul.f32 %v299, %v412
  %v429 = vmul.f32 %v300, %v413
  %v430 = vmul.f32 %v301, %v414
  %v431 = vmul.f32 %v302, %v415
  %v432 = vmul.f32 %v303, %v416
  %v433 = vmul.f32 %v304, %v417
  %v434 = vmul.f32 %v305, %v418
  %v435 = vmul.f32 %v306, %v419
  %v436 = vmul.f32 %v307, %v420
  %v437 = vmul.f32 %v308, %v421
  %v438 = vmul.f32 %v309, %v422
  %v439 = vmul.f32 %v310, %v423
  %v440 = vmul.f32 %v311, %v424
  %v441 = vmul.f32 %v312, %v425
  %v442 = vlaneseq
  %v443 = vshrl.u32 %v442, 7
  %v444 = vsub.s32 0, %v443
  %v445 = vrot.slane %v393, %v444
  %v446 = vmul.f32 %v445, %v426
  %v447 = vmul.f32 %v445, %v427
  %v448 = vmul.f32 %v445, %v428
  %v449 = vmul.f32 %v445, %v429
  %v450 = vmul.f32 %v445, %v430
  %v451 = vmul.f32 %v445, %v431
  %v452 = vmul.f32 %v445, %v432
  %v453 = vmul.f32 %v445, %v433
  %v454 = vmul.f32 %v445, %v434
  %v455 = vmul.f32 %v445, %v435
  %v456 = vmul.f32 %v445, %v436
  %v457 = vmul.f32 %v445, %v437
  %v458 = vmul.f32 %v445, %v438
  %v459 = vmul.f32 %v445, %v439
  %v460 = vmul.f32 %v445, %v440
  %v461 = vmul.f32 %v445, %v441
  %v462 = vld [vmem:[%s2 + $0x2] sm:$0x1]
  %v463 = vlaneseq
  %v464 = vshrl.u32 %v463, 7
  %v465 = vsub.s32 0, %v464
  %v466 = vrot.slane %v462, %v465
  %v467 = vadd.f32 %v446, %v466
  %v468 = vadd.f32 %v447, %v466
  %v469 = vadd.f32 %v448, %v466
  %v470 = vadd.f32 %v449, %v466
  %v471 = vadd.f32 %v450, %v466
  %v472 = vadd.f32 %v451, %v466
  %v473 = vadd.f32 %v452, %v466
  %v474 = vadd.f32 %v453, %v466
  %v475 = vadd.f32 %v454, %v466
  %v476 = vadd.f32 %v455, %v466
  %v477 = vadd.f32 %v456, %v466
  %v478 = vadd.f32 %v457, %v466
  %v479 = vadd.f32 %v458, %v466
  %v480 = vadd.f32 %v459, %v466
  %v481 = vadd.f32 %v460, %v466
  %v482 = vadd.f32 %v461, %v466
  %v483 = vmul.f32 %v467, 0.5
  %v484 = vmul.f32 %v468, 0.5
  %v485 = vmul.f32 %v469, 0.5
  %v486 = vmul.f32 %v470, 0.5
  %v487 = vmul.f32 %v471, 0.5
  %v488 = vmul.f32 %v472, 0.5
  %v489 = vmul.f32 %v473, 0.5
  %v490 = vmul.f32 %v474, 0.5
  %v491 = vmul.f32 %v475, 0.5
  %v492 = vmul.f32 %v476, 0.5
  %v493 = vmul.f32 %v477, 0.5
  %v494 = vmul.f32 %v478, 0.5
  %v495 = vmul.f32 %v479, 0.5
  %v496 = vmul.f32 %v480, 0.5
  %v497 = vmul.f32 %v481, 0.5
  %v498 = vmul.f32 %v482, 0.5
  %v499 = vmul.f32 %v467, 0.70710677
  %v500 = vmul.f32 %v468, 0.70710677
  %v501 = vmul.f32 %v469, 0.70710677
  %v502 = vmul.f32 %v470, 0.70710677
  %v503 = vmul.f32 %v471, 0.70710677
  %v504 = vmul.f32 %v472, 0.70710677
  %v505 = vmul.f32 %v473, 0.70710677
  %v506 = vmul.f32 %v474, 0.70710677
  %v507 = vmul.f32 %v475, 0.70710677
  %v508 = vmul.f32 %v476, 0.70710677
  %v509 = vmul.f32 %v477, 0.70710677
  %v510 = vmul.f32 %v478, 0.70710677
  %v511 = vmul.f32 %v479, 0.70710677
  %v512 = vmul.f32 %v480, 0.70710677
  %v513 = vmul.f32 %v481, 0.70710677
  %v514 = vmul.f32 %v482, 0.70710677
  %v515 = verf.f32.pop %v499
  %v516 = verf.f32.pop %v500
  %v517 = verf.f32.pop %v501
  %v518 = verf.f32.pop %v502
  %v519 = verf.f32.pop %v503
  %v520 = verf.f32.pop %v504
  %v521 = verf.f32.pop %v505
  %v522 = verf.f32.pop %v506
  %v523 = verf.f32.pop %v507
  %v524 = verf.f32.pop %v508
  %v525 = verf.f32.pop %v509
  %v526 = verf.f32.pop %v510
  %v527 = verf.f32.pop %v511
  %v528 = verf.f32.pop %v512
  %v529 = verf.f32.pop %v513
  %v530 = verf.f32.pop %v514
  %v531 = vadd.f32 %v515, 1.0
  %v532 = vadd.f32 %v516, 1.0
  %v533 = vadd.f32 %v517, 1.0
  %v534 = vadd.f32 %v518, 1.0
  %v535 = vadd.f32 %v519, 1.0
  %v536 = vadd.f32 %v520, 1.0
  %v537 = vadd.f32 %v521, 1.0
  %v538 = vadd.f32 %v522, 1.0
  %v539 = vadd.f32 %v523, 1.0
  %v540 = vadd.f32 %v524, 1.0
  %v541 = vadd.f32 %v525, 1.0
  %v542 = vadd.f32 %v526, 1.0
  %v543 = vadd.f32 %v527, 1.0
  %v544 = vadd.f32 %v528, 1.0
  %v545 = vadd.f32 %v529, 1.0
  %v546 = vadd.f32 %v530, 1.0
  %v547 = vmul.f32 %v483, %v531
  %v548 = vmul.f32 %v484, %v532
  %v549 = vmul.f32 %v485, %v533
  %v550 = vmul.f32 %v486, %v534
  %v551 = vmul.f32 %v487, %v535
  %v552 = vmul.f32 %v488, %v536
  %v553 = vmul.f32 %v489, %v537
  %v554 = vmul.f32 %v490, %v538
  %v555 = vmul.f32 %v491, %v539
  %v556 = vmul.f32 %v492, %v540
  %v557 = vmul.f32 %v493, %v541
  %v558 = vmul.f32 %v494, %v542
  %v559 = vmul.f32 %v495, %v543
  %v560 = vmul.f32 %v496, %v544
  %v561 = vmul.f32 %v497, %v545
  %v562 = vmul.f32 %v498, %v546
  %563 = vst.msk [vmem:[%s3] sm:$0xff] %vm231, %v547
  %564 = vst.msk [vmem:[%s3 + $0x8] sm:$0xff] %vm231, %v548
  %565 = vst.msk [vmem:[%s3 + $0x10] sm:$0xff] %vm231, %v549
  %566 = vst.msk [vmem:[%s3 + $0x18] sm:$0xff] %vm231, %v550
  %567 = vst.msk [vmem:[%s3 + $0x20] sm:$0xff] %vm231, %v551
  %568 = vst.msk [vmem:[%s3 + $0x28] sm:$0xff] %vm231, %v552
  %569 = vst.msk [vmem:[%s3 + $0x30] sm:$0xff] %vm231, %v553
  %570 = vst.msk [vmem:[%s3 + $0x38] sm:$0xff] %vm231, %v554
  %571 = vst.msk [vmem:[%s3 + $0x40] sm:$0xff] %vm231, %v555
  %572 = vst.msk [vmem:[%s3 + $0x48] sm:$0xff] %vm231, %v556
  %573 = vst.msk [vmem:[%s3 + $0x50] sm:$0xff] %vm231, %v557
  %574 = vst.msk [vmem:[%s3 + $0x58] sm:$0xff] %vm231, %v558
  %575 = vst.msk [vmem:[%s3 + $0x60] sm:$0xff] %vm231, %v559
  %576 = vst.msk [vmem:[%s3 + $0x68] sm:$0xff] %vm231, %v560
  %577 = vst.msk [vmem:[%s3 + $0x70] sm:$0xff] %vm231, %v561
  %578 = vst.msk [vmem:[%s3 + $0x78] sm:$0xff] %vm231, %v562
  // Predicated region
  $region14: #{tpu_custom_call.1} parent=0 // pred_check
    _
  $region15: #{tpu_custom_call.1} parent=0 // pred_check_branch
    %580 = sbr.rel (0) target = $region17
  $region16: #{tpu_custom_call.1} parent=0 // pred_region
    _
  $region17: #{tpu_custom_call.1} parent=0 // pred_fallthru
    _
  // Predicated region
  $region18: #{tpu_custom_call.1} parent=0 // pred_check
    _
  $region19: #{tpu_custom_call.1} parent=0 // pred_check_branch
    %582 = sbr.rel (0) target = $region21
  $region20: #{tpu_custom_call.1} parent=0 // pred_region
    _
  $region21: #{tpu_custom_call.1} parent=0 // pred_fallthru
    _

</llo_original>
